<compile_context>
chip_gen: v7x
topology: tpu7x:2x2x1
jax: 0.10.0
libtpu: 0.0.40
codegen_flags: <defaults>
</compile_context>

<pallas_src>
import math

import jax
import jax.numpy as jnp
from jax.experimental import pallas as pl
from jax.experimental.pallas import tpu as pltpu


def _lcm(a, b):
    return a * b // math.gcd(a, b)


# Target bytes of ONE data-operand block (input block == output block size).
# ~4 MiB/operand -> with double buffering about 2*(2*4 MiB) + small bias block
# (~17-20 MiB) of VMEM: fits v7x's 64 MiB physical / 32 MiB default-scoped VMEM
# and is granted explicitly on v5e (16 MiB default scoped) via vmem_limit_bytes.
_TARGET_TILE_BYTES = 4 << 20


# ---------------------------------------------------------------------------
# Kernel: data block + row-periodic bias block (replicated in-kernel).
# ---------------------------------------------------------------------------
def _bias_add_kernel(a_ref, b_ref, o_ref):
    b = b_ref[...]
    tr, br = a_ref.shape[0], b.shape[0]
    if tr != br:                         # trace-time constant
        # Replicate the bias period along sublanes on the VPU.  br is a
        # multiple of 8 here, so the broadcast+collapse is tile-aligned
        # (no relayout) and costs nothing in an HBM-bound add.
        reps = tr // br
        b = jnp.broadcast_to(b[None], (reps,) + b.shape).reshape(tr, b.shape[1])
    o_ref[...] = a_ref[...] + b


# ---------------------------------------------------------------------------
# Tiling decisions
# ---------------------------------------------------------------------------
def _choose_tiles(R, C, P, itemsize, target_bytes):
    """Return (row_tile, col_tile, whole_rows).

    row_tile is a multiple of unit = lcm(P, sublane-pack) so every block starts
    at bias phase 0 and the in-kernel replication stays sublane-aligned;
    col_tile is a multiple of 128 (or the full C when C % 128 != 0).  When
    R < unit we fall back to a single whole-row block (whole_rows=True)."""
    sub = max(8, 32 // itemsize)         # sublane pack: 8 f32 / 16 bf16 / 32 i8
    unit = _lcm(P, sub)

    # ---- column tile: bounds every block even for large P = N, C = N*D ----
    if C % 128 == 0 and C > 128:
        cap = (target_bytes // max(1, unit * itemsize)) // 128 * 128
        tc = min(C, max(128, cap))
    else:
        tc = C                           # not splittable without masked stores

    # ---- row tile ----------------------------------------------------------
    if R < unit:
        return R, tc, True               # single, whole-row block
    row_budget = max(1, target_bytes // (tc * itemsize))
    tr = max(unit, row_budget // unit * unit)
    if R > unit:
        # keep >= 2 row blocks so dimension_semantics="parallel" can shard the
        # grid across v7x's two TensorCores even for medium inputs
        tr = min(tr, (R - 1) // unit * unit)
    else:
        tr = unit
    return tr, tc, False


def _maybe_fold_rows(a2d, table):
    """If the lane width C is not a multiple of 128, fold m = lcm(C,128)//C
    consecutive rows into one row (lane-dense stores are the biggest single
    lever for a streaming kernel).  Handles any bias period P, not just P==1."""
    R, C = a2d.shape
    P = table.shape[0]
    if C % 128 == 0:
        return a2d, table
    m = _lcm(C, 128) // C
    if m <= 1 or R % _lcm(P, m) != 0:
        return a2d, table                # cannot fold cleanly; accept masked stores
    new_p = _lcm(P, m) // m
    # folded row q packs original rows q*m .. q*m+m-1 -> concat their bias rows
    idx = jnp.arange(new_p * m) % P
    new_table = table[idx].reshape(new_p, m * C)
    return a2d.reshape(R // m, m * C), new_table


def _row_periodic_bias_add(a2d, table, target_tile_bytes=_TARGET_TILE_BYTES,
                           donate=False):
    """a2d: (R, C); table: (P, C) with R % P == 0.  Row r gets table[r % P]."""
    R, C = a2d.shape
    P = table.shape[0]
    assert R % P == 0, "row count must be a multiple of the bias period"
    itemsize = jnp.dtype(a2d.dtype).itemsize
    tr, tc, whole = _choose_tiles(R, C, P, itemsize, target_tile_bytes)

    if whole:
        # R < lcm(P, sublane): one unaligned row block; replicate the (tiny,
        # <= 8*P-row) table to the R rows in the wrapper so the kernel is a
        # plain same-shape add.
        bias_arr = jnp.tile(table, (R // P, 1))
    else:
        sub = max(8, 32 // itemsize)
        unit = _lcm(P, sub)
        bias_arr = jnp.tile(table, (unit // P, 1))   # <= 8 copies of the period
    bias_rows = bias_arr.shape[0]
    assert tr % bias_rows == 0

    grid = (pl.cdiv(R, tr), pl.cdiv(C, tc))

    # Explicit VMEM budget: 2 buffers each for the input and output data blocks
    # plus 2 buffers for the small bias block, with ~30% + 2 MiB headroom.
    data_blk = tr * tc * itemsize
    bias_blk = bias_rows * tc * itemsize
    vmem_limit = int(2 * (2 * data_blk + bias_blk) * 1.3) + (2 << 20)
    vmem_limit = max(8 << 20, min(vmem_limit, 112 << 20))

    kwargs = {}
    if donate:
        # Elementwise add is naturally in-place; with a donated input this
        # avoids allocating a second O(R*C) HBM buffer.
        kwargs["input_output_aliases"] = {0: 0}

    return pl.pallas_call(
        _bias_add_kernel,
        out_shape=jax.ShapeDtypeStruct((R, C), a2d.dtype),
        grid=grid,
        in_specs=[pl.BlockSpec((tr, tc), lambda i, j: (i, j)),
                  pl.BlockSpec((bias_rows, tc), lambda i, j: (0, j))],
        out_specs=pl.BlockSpec((tr, tc), lambda i, j: (i, j)),
        compiler_params=pltpu.CompilerParams(
            dimension_semantics=("parallel", "parallel"),
            vmem_limit_bytes=vmem_limit),
        **kwargs,
    )(a2d, bias_arr)


# ---------------------------------------------------------------------------
# Wrappers (one per _Bias order)
# ---------------------------------------------------------------------------
def bias_order0(A, bias0, target_tile_bytes=_TARGET_TILE_BYTES, donate=False):
    """A: [B, D], bias0: [D] -> [B, D]"""
    B, D = A.shape
    a2d, table = _maybe_fold_rows(A, bias0.reshape(1, D).astype(A.dtype))
    out = _row_periodic_bias_add(a2d, table, target_tile_bytes, donate)
    return out.reshape(B, D)


def bias_order1(A, bias0, target_tile_bytes=_TARGET_TILE_BYTES, donate=False):
    """A: [B, N, D], bias0: [D] -> [B, N, D] (broadcast add over B, N)."""
    B, N, D = A.shape
    a2d = A.reshape(B * N, D)            # bias period = 1 row of D features
    a2d, table = _maybe_fold_rows(a2d, bias0.reshape(1, D).astype(A.dtype))
    out = _row_periodic_bias_add(a2d, table, target_tile_bytes, donate)
    return out.reshape(B, N, D)


def bias_order2(A, bias0, bias1, target_tile_bytes=_TARGET_TILE_BYTES,
                donate=False):
    """A: [B, N, N, D]; off-diag (j != i) += bias0, diag (j == i) += bias1."""
    Bsz, N, N2, D = A.shape
    assert N == N2
    # Precompute the (N, N*D) bias table in the wrapper: O(N^2 D) bytes, small
    # next to the O(B N^2 D) stream, and it removes per-element iota/compare/
    # select from the kernel.  jnp.where keeps it dtype-safe (ints included).
    eye = jnp.eye(N, dtype=jnp.bool_)[:, :, None]                # (N, N, 1)
    table = jnp.where(eye,
                      bias1.astype(A.dtype)[None, None, :],
                      bias0.astype(A.dtype)[None, None, :]).reshape(N, N * D)
    # Flattened row r = (batch r // N, node-row i = r % N): period N, width N*D.
    a2d = A.reshape(Bsz * N, N * D)
    a2d, table = _maybe_fold_rows(a2d, table)
    out = _row_periodic_bias_add(a2d, table, target_tile_bytes, donate)
    return out.reshape(Bsz, N, N, D)


# ---------------------------------------------------------------------------
# Pure-JAX references (mirror the PyTorch module exactly)
# ---------------------------------------------------------------------------
def ref_order0(A, bias0):
    return A + bias0[None, :]


def ref_order1(A, bias0):
    return A + bias0[None, None, :]


def ref_order2(A, bias0, bias1):
    n = A.shape[1]
    eye = jnp.eye(n, dtype=A.dtype)[:, :, None]
    bias = (1.0 - eye) * bias0[None, None, :] + eye * bias1[None, None, :]
    return A + bias[None]


if __name__ == "__main__":
    key = jax.random.PRNGKey(0)
    k0, k1, k1b, k2, k2b, kb0, kb1 = jax.random.split(key, 7)

    Bsz, N, D = 2, 8, 32

    # _Bias.reset_parameters() initializes biases to 0.0; use deterministic
    # nonzero values so the kernel math is actually exercised.
    bias0 = jax.random.normal(kb0, (D,), dtype=jnp.float32)
    bias1 = jax.random.normal(kb1, (D,), dtype=jnp.float32)

    # ord_out = 0: plain tensor [B, D]  (also exercises the in-place alias path)
    x0 = jax.random.normal(k0, (Bsz, D), dtype=jnp.float32)
    ref0 = ref_order0(x0, bias0)
    y0 = jax.block_until_ready(bias_order0(x0, bias0, donate=True))
    assert jnp.allclose(y0, ref0, atol=1e-6), "order-0 mismatch"

    # ord_out = 1: node features [B, N, D] (folded to lane-dense 128-wide rows)
    x1 = jax.random.normal(k1, (Bsz, N, D), dtype=jnp.float32)
    y1 = jax.block_until_ready(bias_order1(x1, bias0))
    assert jnp.allclose(y1, ref_order1(x1, bias0), atol=1e-6), "order-1 mismatch"

    # ord_out = 1 with R not divisible by the row tile -> partial last row block
    x1b = jax.random.normal(k1b, (3, 5, D), dtype=jnp.float32)
    y1b = jax.block_until_ready(bias_order1(x1b, bias0))
    assert jnp.allclose(y1b, ref_order1(x1b, bias0), atol=1e-6), \
        "order-1 (ragged rows) mismatch"

    # ord_out = 2: node-pair features [B, N, N, D], separate diag/off-diag bias
    x2 = jax.random.normal(k2, (Bsz, N, N, D), dtype=jnp.float32)
    ref2 = ref_order2(x2, bias0, bias1)
    y2 = jax.block_until_ready(bias_order2(x2, bias0, bias1))
    assert jnp.allclose(y2, ref2, atol=1e-6), "order-2 mismatch"

    # Same input, tiny tile budget -> exercises the 2-D (rows x cols) grid.
    y2t = jax.block_until_ready(
        bias_order2(x2, bias0, bias1, target_tile_bytes=4 * 1024))
    assert jnp.allclose(y2t, ref2, atol=1e-6), "order-2 (2-D grid) mismatch"

    # Larger batch -> in-kernel bias replication (reps > 1) + partial row block.
    x2b = jax.random.normal(k2b, (4, N, N, D), dtype=jnp.float32)
    y2b = jax.block_until_ready(bias_order2(x2b, bias0, bias1))
    assert jnp.allclose(y2b, ref_order2(x2b, bias0, bias1), atol=1e-6), \
        "order-2 (replicated bias) mismatch"

    # TODO(synk): the PyTorch wrapper's `batch_like(G, ...)` Batch re-wrapping /
    # masking bookkeeping is container glue with no Pallas equivalent; only the
    # tensor arithmetic (G.A + bias) is implemented here.
    print("KERNEL_OK")
</pallas_src>

<mosaic_0001>
module attributes {stable_mosaic.version = 11 : i64} {
  func.func @_bias_add_kernel(%arg0: i32, %arg1: i32, %arg2: memref<2x32xf32, #tpu.memory_space<vmem>>, %arg3: memref<2x32xf32, #tpu.memory_space<vmem>>, %arg4: memref<2x32xf32, #tpu.memory_space<vmem>>) attributes {dimension_semantics = [#tpu.dimension_semantics<parallel>, #tpu.dimension_semantics<parallel>], iteration_bounds = array<i64: 1, 1>, scalar_prefetch = 0 : i64, scratch_operands = 0 : i64, tpu.core_type = #tpu.core_type<tc>, window_params = [{transform_indices = @transform_0, window_bounds = array<i64: 2, 32>}, {transform_indices = @transform_1, window_bounds = array<i64: 2, 32>}, {transform_indices = @transform_2, window_bounds = array<i64: 2, 32>}]} {
    %c0 = arith.constant 0 : index
    %c0_0 = arith.constant 0 : index
    %0 = vector.load %arg3[%c0, %c0_0] : memref<2x32xf32, #tpu.memory_space<vmem>>, vector<2x32xf32>
    %c0_1 = arith.constant 0 : index
    %c0_2 = arith.constant 0 : index
    %1 = vector.load %arg2[%c0_1, %c0_2] : memref<2x32xf32, #tpu.memory_space<vmem>>, vector<2x32xf32>
    %2 = arith.addf %1, %0 : vector<2x32xf32>
    %c0_3 = arith.constant 0 : index
    %c0_4 = arith.constant 0 : index
    %3 = vector.load %arg4[%c0_3, %c0_4] : memref<2x32xf32, #tpu.memory_space<vmem>>, vector<2x32xf32>
    tpu.vector_store %arg4[%c0_3, %c0_4], %2 {strides = array<i32>} : memref<2x32xf32, #tpu.memory_space<vmem>>, vector<2x32xf32>,
    return
  }
  func.func @transform_0(%arg0: i32, %arg1: i32) -> (i32, i32) {
    %c0_i32 = arith.constant 0 : i32
    return %arg0, %arg1 : i32, i32
  }
  func.func @transform_1(%arg0: i32, %arg1: i32) -> (i32, i32) {
    %c0_i32 = arith.constant 0 : i32
    %c0_i32_0 = arith.constant 0 : i32
    return %c0_i32, %arg1 : i32, i32
  }
  func.func @transform_2(%arg0: i32, %arg1: i32) -> (i32, i32) {
    %c0_i32 = arith.constant 0 : i32
    return %arg0, %arg1 : i32, i32
  }
}

</mosaic_0001>

<llo_original>
// kernel: tpu_custom_call.1
$region0: #{tpu_custom_call.1}
  #allocation0 [shape = 'u32[]', space=smem, size = 0x4, offset = 0x4, fixed_abs, tag = 'smem constant byte address 0x4 - core index']
  #allocation1 [shape = 'u32[144,128]{1,0:T(1,128)}', space=vmem, size = 0x12000, scoped, tag = 'internal scratch']
  %s0 = inlined_call_operand.hbm [shape: f32[2,32], index: 0, kind: input, shape index: {}, may-alias: {0,2}]
  %s1 = inlined_call_operand.vmem [shape: f32[2,32], index: 1, kind: input, shape index: {}]
  %s2 = inlined_call_operand.hbm [shape: f32[2,32], index: 2, kind: output, shape index: {}, may-alias: {0,2}]
  %s3 = sld [smem:[#allocation0]]
  $region22: #{tpu_custom_call.1} parent=0
    _
  %s5 = ssub.s32 1, %s3
  %s6 = scalar_select 0, %s5, %s3
  $region1: #{tpu_custom_call.1} parent=0
    #allocation2 [shape = 'u8[1024]{0}', space=vmem, size = 0x400, scoped, tag = 'input window, operand 0, single buffered']
    #allocation3 [shape = 's32[1]{0}', space=sflag, size = 0x4, scoped, tag = 'scoped memory for tpu_custom_call.1']
    #allocation4 [shape = 's32[1]{0}', space=sflag, size = 0x4, scoped, tag = 'scoped memory for tpu_custom_call.1']
    #allocation5 [shape = 'u8[1024]{0}', space=vmem, size = 0x400, scoped, tag = 'output window, operand 0, single buffered']
    %7 = vsyncpa [#allocation3], 0
    %8 = vsyncpa [#allocation4], 0
    // Predicated region
    $region2: #{tpu_custom_call.1} parent=1 // pred_check
      _
    $region3: #{tpu_custom_call.1} parent=1 // pred_check_branch
      %10 = sbr.rel (0) target = $region5
    $region4: #{tpu_custom_call.1} parent=1 // pred_region
      %s12 = ssub.s32 32, 32
      %13 = vsyncadd [#allocation3], %s12
      %s15 = sshll.u32 [#allocation2], 4
      %s16 = int_to_ptr.vmem [resolvable:$true] %s15
      %18 = dma.hbm_to_vmem [thread:$0]  %s0, 32, %s16, [#allocation3]
    $region5: #{tpu_custom_call.1} parent=1 // pred_fallthru
      _
    // Predicated region
    $region6: #{tpu_custom_call.1} parent=1 // pred_check
      _
    $region7: #{tpu_custom_call.1} parent=1 // pred_check_branch
      %20 = sbr.rel (0) target = $region9
    $region8: #{tpu_custom_call.1} parent=1 // pred_region
      _
    $region9: #{tpu_custom_call.1} parent=1 // pred_fallthru
      _
    // Predicated region
    $region10: #{tpu_custom_call.1} parent=1 // pred_check
      _
    $region11: #{tpu_custom_call.1} parent=1 // pred_check_branch
      %22 = sbr.rel (0) target = $region13
    $region12: #{tpu_custom_call.1} parent=1 // pred_region
      %23 = dma.done [#allocation3], 32
    $region13: #{tpu_custom_call.1} parent=1 // pred_fallthru
      _
    %v24 = vld [vmem:[%s1] sm:$0x3]
    %v25 = vld [vmem:[#allocation2] sm:$0x3]
    %v26 = vadd.f32 %v25, %v24
    %vm27 = vcmask 254976
    %28 = vst.msk [vmem:[#allocation5] sm:$0x3] %vm27, %v26
    // Predicated region
    $region14: #{tpu_custom_call.1} parent=1 // pred_check
      _
    $region15: #{tpu_custom_call.1} parent=1 // pred_check_branch
      %30 = sbr.rel (0) target = $region17
    $region16: #{tpu_custom_call.1} parent=1 // pred_region
      %s32 = ssub.s32 32, 32
      %33 = vsyncadd [#allocation4], %s32
      %s35 = sshll.u32 [#allocation5], 4
      %s36 = int_to_ptr.vmem [resolvable:$true] %s35
      %38 = dma.vmem_to_hbm [thread:$0]  %s36, 32, %s2, [#allocation4]
    $region17: #{tpu_custom_call.1} parent=1 // pred_fallthru
      _
    // Predicated region
    $region18: #{tpu_custom_call.1} parent=1 // pred_check
      _
    $region19: #{tpu_custom_call.1} parent=1 // pred_check_branch
      %40 = sbr.rel (0) target = $region21
    $region20: #{tpu_custom_call.1} parent=1 // pred_region
      %41 = dma.done [#allocation4], 32
    $region21: #{tpu_custom_call.1} parent=1 // pred_fallthru
      _
    %42 = vsyncpa [#allocation3], 1
    %43 = vsyncpa [#allocation4], 1

</llo_original>
